<compile_context>
chip_gen: v5e
topology: v5e:2x2
jax: 0.10.0
libtpu: 0.0.40
codegen_flags: <defaults>
</compile_context>

<pallas_src>
import jax
import jax.numpy as jnp
from jax.experimental import pallas as pl
from jax.experimental.pallas import tpu as pltpu


def _round_up(x, m):
    return ((x + m - 1) // m) * m


def _make_kernel(block_rows, lane, inner, rows, inv_scale):
    def kernel(x1_ref, x2_ref, out_ref, acc_ref):
        p = pl.program_id(0)
        i = pl.program_id(1)

        @pl.when(i == 0)
        def _():
            acc_ref[...] = jnp.zeros_like(acc_ref)

        # Tail mask built from the *intended* (unclamped) block index: any row
        # past the true row count (partial last block, or a block that the
        # index_map had to clamp) contributes exactly zero.
        blk = p * inner + i
        row0 = blk * block_rows
        gid = row0 + jax.lax.broadcasted_iota(jnp.int32, (block_rows, 1), 0)
        valid = gid < rows

        d = x1_ref[...].astype(jnp.float32) - x2_ref[...].astype(jnp.float32)
        d = jnp.where(valid, d, 0.0)
        acc_ref[...] += d * d            # pure VPU work under the DMA

        @pl.when(i == pl.num_programs(1) - 1)
        def _():
            s = jnp.sum(acc_ref[...]) * inv_scale   # fold 1/(2*batch) here
            out_ref[...] = jnp.full(out_ref.shape, s, dtype=out_ref.dtype)

    return kernel


def color_loss(x1, x2):
    """sum((x1 - x2)^2) / (2 * batch)  -- matches torch ColorLoss.forward."""
    assert x1.shape == x2.shape
    batch = x1.shape[0]
    lane = 128

    f1 = x1.reshape(-1)
    f2 = x2.reshape(-1)
    n = f1.shape[0]

    # View as (rows, 128).  Zero padding (only the <128-element remainder)
    # contributes (0 - 0)^2 = 0 to the sum.
    rem = n % lane
    if rem:
        f1 = jnp.pad(f1, (0, lane - rem))
        f2 = jnp.pad(f2, (0, lane - rem))
    rows = f1.shape[0] // lane
    a = f1.reshape(rows, lane)
    b = f2.reshape(rows, lane)

    # Sublane multiple required by the input dtype's packing (f32:8, bf16:16,
    # int8/fp8:32).  Block capped at 2048 rows: ~1 MiB f32 per input block ->
    # 2 inputs x 2 pipeline buffers x 1 MiB + 1 MiB scratch ~= 5 MiB VMEM,
    # safely under the default scoped VMEM on v5e (16 MiB) / v6e / v7x (32 MiB).
    sub_mult = {1: 32, 2: 16, 4: 8}.get(jnp.dtype(x1.dtype).itemsize, 8)
    block_rows = min(2048, _round_up(rows, sub_mult))
    n_blocks = pl.cdiv(rows, block_rows)

    # Leading parallel axis: lets v7x's two TensorCores each stream half the
    # row blocks; on v5e/v6e (single TC) it is just a serial outer loop.
    num_parallel = 2 if n_blocks >= 2 else 1
    inner = pl.cdiv(n_blocks, num_parallel)

    inv_scale = 1.0 / (2.0 * batch)
    kernel = _make_kernel(block_rows, lane, inner, rows, inv_scale)

    def in_map(p, i):
        # Clamp so the DMA never walks past the array; the kernel's row mask
        # (based on the unclamped index) zeroes any such block's contribution.
        blk = jnp.minimum(p * inner + i, n_blocks - 1)
        return (blk, 0)

    partials = pl.pallas_call(
        kernel,
        out_shape=jax.ShapeDtypeStruct((num_parallel, 8, lane), jnp.float32),
        grid_spec=pltpu.PrefetchScalarGridSpec(
            num_scalar_prefetch=0,
            grid=(num_parallel, inner),
            in_specs=[
                pl.BlockSpec((block_rows, lane), in_map),
                pl.BlockSpec((block_rows, lane), in_map),
            ],
            out_specs=pl.BlockSpec((1, 8, lane), lambda p, i: (p, 0, 0)),
            scratch_shapes=[pltpu.VMEM((block_rows, lane), jnp.float32)],
        ),
        compiler_params=pltpu.CompilerParams(
            dimension_semantics=("parallel", "arbitrary"),
        ),
    )(a, b)

    # Each parallel index broadcast its (already scaled) partial sum into its
    # own (8,128) block; take one element per block and add the partials.
    return jnp.sum(partials[:, 0, 0])


if __name__ == "__main__":
    key = jax.random.PRNGKey(0)
    k1, k2 = jax.random.split(key)
    # small NCHW inputs consistent with an image-loss module
    x1 = jax.random.normal(k1, (2, 4, 16, 16), dtype=jnp.float32)
    x2 = jax.random.normal(k2, (2, 4, 16, 16), dtype=jnp.float32)

    loss_fn = jax.jit(color_loss)
    out = jax.block_until_ready(loss_fn(x1, x2))

    # pure-JAX reference check
    ref = jnp.sum((x1 - x2) ** 2) / (2 * x1.shape[0])
    assert jnp.allclose(out, ref, rtol=1e-5, atol=1e-5), (out, ref)

    print("KERNEL_OK")
</pallas_src>

<mosaic_0001>
module attributes {stable_mosaic.version = 11 : i64} {
  func.func @kernel(%arg0: i32, %arg1: i32, %arg2: memref<16x128xf32, #tpu.memory_space<vmem>>, %arg3: memref<16x128xf32, #tpu.memory_space<vmem>>, %arg4: memref<1x8x128xf32, #tpu.memory_space<vmem>>, %arg5: memref<16x128xf32, #tpu.memory_space<vmem>>) attributes {dimension_semantics = [#tpu.dimension_semantics<parallel>, #tpu.dimension_semantics<arbitrary>], iteration_bounds = array<i64: 1, 1>, scalar_prefetch = 0 : i64, scratch_operands = 1 : i64, tpu.core_type = #tpu.core_type<tc>, window_params = [{transform_indices = @transform_0, window_bounds = array<i64: 16, 128>}, {transform_indices = @transform_1, window_bounds = array<i64: 16, 128>}, {transform_indices = @transform_2, window_bounds = array<i64: 1, 8, 128>}]} {
    %c0_i32 = arith.constant 0 : i32
    %0 = arith.cmpi eq, %arg1, %c0_i32 : i32
    %1 = arith.extui %0 : i1 to i32
    %c0_i32_0 = arith.constant 0 : i32
    %2 = arith.cmpi ne, %1, %c0_i32_0 : i32
    scf.if %2 {
      %cst_11 = arith.constant 0.000000e+00 : f32
      %25 = vector.broadcast %cst_11 : f32 to vector<16x128xf32>
      %c0_12 = arith.constant 0 : index
      %c0_13 = arith.constant 0 : index
      %26 = vector.load %arg5[%c0_12, %c0_13] : memref<16x128xf32, #tpu.memory_space<vmem>>, vector<16x128xf32>
      tpu.vector_store %arg5[%c0_12, %c0_13], %25 {strides = array<i32>} : memref<16x128xf32, #tpu.memory_space<vmem>>, vector<16x128xf32>,
    } else {
    }
    %c1_i32 = arith.constant 1 : i32
    %3 = arith.muli %arg0, %c1_i32 : i32
    %4 = arith.addi %3, %arg1 : i32
    %c16_i32 = arith.constant 16 : i32
    %5 = arith.muli %4, %c16_i32 : i32
    %6 = tpu.iota {dimensions = array<i32: 0>} : vector<16x1xi32>
    %7 = vector.broadcast %5 : i32 to vector<16x1xi32>
    %8 = arith.addi %7, %6 : vector<16x1xi32>
    %c16_i32_1 = arith.constant 16 : i32
    %9 = vector.broadcast %c16_i32_1 : i32 to vector<16x1xi32>
    %10 = arith.cmpi slt, %8, %9 : vector<16x1xi32>
    %c0 = arith.constant 0 : index
    %c0_2 = arith.constant 0 : index
    %11 = vector.load %arg2[%c0, %c0_2] : memref<16x128xf32, #tpu.memory_space<vmem>>, vector<16x128xf32>
    %c0_3 = arith.constant 0 : index
    %c0_4 = arith.constant 0 : index
    %12 = vector.load %arg3[%c0_3, %c0_4] : memref<16x128xf32, #tpu.memory_space<vmem>>, vector<16x128xf32>
    %13 = arith.subf %11, %12 : vector<16x128xf32>
    %cst = arith.constant 0.000000e+00 : f32
    %14 = vector.shape_cast %10 : vector<16x1xi1> to vector<16x1xi1>
    %15 = vector.broadcast %14 : vector<16x1xi1> to vector<16x128xi1>
    %16 = vector.broadcast %cst : f32 to vector<16x128xf32>
    %17 = arith.select %15, %13, %16 : vector<16x128xi1>, vector<16x128xf32>
    %c0_5 = arith.constant 0 : index
    %c0_6 = arith.constant 0 : index
    %18 = vector.load %arg5[%c0_5, %c0_6] : memref<16x128xf32, #tpu.memory_space<vmem>>, vector<16x128xf32>
    %19 = arith.mulf %17, %17 : vector<16x128xf32>
    %20 = arith.addf %18, %19 : vector<16x128xf32>
    %c0_7 = arith.constant 0 : index
    %c0_8 = arith.constant 0 : index
    %21 = vector.load %arg5[%c0_7, %c0_8] : memref<16x128xf32, #tpu.memory_space<vmem>>, vector<16x128xf32>
    tpu.vector_store %arg5[%c0_7, %c0_8], %20 {strides = array<i32>} : memref<16x128xf32, #tpu.memory_space<vmem>>, vector<16x128xf32>,
    %c0_i32_9 = arith.constant 0 : i32
    %22 = arith.cmpi eq, %arg1, %c0_i32_9 : i32
    %23 = arith.extui %22 : i1 to i32
    %c0_i32_10 = arith.constant 0 : i32
    %24 = arith.cmpi ne, %23, %c0_i32_10 : i32
    scf.if %24 {
      %c0_11 = arith.constant 0 : index
      %c0_12 = arith.constant 0 : index
      %25 = vector.load %arg5[%c0_11, %c0_12] : memref<16x128xf32, #tpu.memory_space<vmem>>, vector<16x128xf32>
      %26 = vector.shape_cast %25 : vector<16x128xf32> to vector<1x16x128xf32>
      %cst_13 = arith.constant dense<0.000000e+00> : vector<1xf32>
      %27 = vector.multi_reduction <add>, %26, %cst_13 [1, 2] : vector<1x16x128xf32> to vector<1xf32>
      %28 = vector.shape_cast %27 : vector<1xf32> to vector<1x1x1xf32>
      %29 = vector.extract %28[0, 0, 0] : f32 from vector<1x1x1xf32>
      %cst_14 = arith.constant 2.500000e-01 : f32
      %30 = arith.mulf %29, %cst_14 : f32
      %31 = vector.broadcast %30 : f32 to vector<1x8x128xf32>
      %c0_15 = arith.constant 0 : index
      %c0_16 = arith.constant 0 : index
      %c0_17 = arith.constant 0 : index
      %32 = vector.load %arg4[%c0_15, %c0_16, %c0_17] : memref<1x8x128xf32, #tpu.memory_space<vmem>>, vector<1x8x128xf32>
      tpu.vector_store %arg4[%c0_15, %c0_16, %c0_17], %31 {strides = array<i32>} : memref<1x8x128xf32, #tpu.memory_space<vmem>>, vector<1x8x128xf32>,
    } else {
    }
    return
  }
  func.func @transform_0(%arg0: i32, %arg1: i32) -> (i32, i32) {
    %c1_i32 = arith.constant 1 : i32
    %0 = arith.muli %arg0, %c1_i32 : i32
    %1 = arith.addi %0, %arg1 : i32
    %c0_i32 = arith.constant 0 : i32
    %2 = arith.minsi %1, %c0_i32 : i32
    %c0_i32_0 = arith.constant 0 : i32
    %c0_i32_1 = arith.constant 0 : i32
    return %2, %c0_i32_0 : i32, i32
  }
  func.func @transform_1(%arg0: i32, %arg1: i32) -> (i32, i32) {
    %c1_i32 = arith.constant 1 : i32
    %0 = arith.muli %arg0, %c1_i32 : i32
    %1 = arith.addi %0, %arg1 : i32
    %c0_i32 = arith.constant 0 : i32
    %2 = arith.minsi %1, %c0_i32 : i32
    %c0_i32_0 = arith.constant 0 : i32
    %c0_i32_1 = arith.constant 0 : i32
    return %2, %c0_i32_0 : i32, i32
  }
  func.func @transform_2(%arg0: i32, %arg1: i32) -> (i32, i32, i32) {
    %c0_i32 = arith.constant 0 : i32
    %c0_i32_0 = arith.constant 0 : i32
    %c0_i32_1 = arith.constant 0 : i32
    return %arg0, %c0_i32, %c0_i32_0 : i32, i32, i32
  }
}

</mosaic_0001>

<llo_original>
// kernel: color_loss.1
$region0: #{color_loss.1}
  #allocation0 [shape = 'u32[]', space=smem, size = 0x4, offset = 0x4, fixed_abs, tag = 'smem constant byte address 0x4 - core index']
  #allocation1 [shape = 'u32[72,128]{1,0:T(1,128)}', space=vmem, size = 0x9000, scoped, tag = 'internal scratch']
  #allocation2 [shape = 'f32[16,128]{1,0:T(8,128)}', space=vmem, size = 0x2000, scoped, tag = 'scratch operand']
  %s0 = inlined_call_operand.vmem [shape: f32[16,128], index: 0, kind: input, shape index: {}]
  %s1 = inlined_call_operand.vmem [shape: f32[16,128], index: 1, kind: input, shape index: {}]
  %s2 = inlined_call_operand.vmem [shape: f32[1,8,128], index: 2, kind: output, shape index: {}]
  %s3 = sld [smem:[#allocation0]]
  $region26: #{color_loss.1} parent=0
    _
  %s5 = ssub.s32 1, %s3
  %s6 = scalar_select 0, %s5, %s3
  // Predicated region
  $region2: #{color_loss.1} parent=0 // pred_check
    _
  $region3: #{color_loss.1} parent=0 // pred_check_branch
    %8 = sbr.rel (0) target = $region5
  $region4: #{color_loss.1} parent=0 // pred_region
    %s9 = sadd.s32 0, 0
    %p10 = scmp.lt.s32.totalorder %s9, 0
    %s11 = scalar_select %p10, %s9, 0
    %s12 = smul.u32 2, %s11
    %p13 = scmp.lt.s32.totalorder %s12, 1
    %s14 = scalar_select %p13, %s12, 1
    %s15 = smul.addr %s14, 8
    %s16 = scalar_lea.vmem %s0, %s15
    %s17 = sadd.s32 0, 0
    %p18 = scmp.lt.s32.totalorder %s17, 0
    %s19 = scalar_select %p18, %s17, 0
    %s20 = smul.u32 2, %s19
  $region5: #{color_loss.1} parent=0 // pred_fallthru
    _
  // Predicated region
  $region6: #{color_loss.1} parent=0 // pred_check
    _
  $region7: #{color_loss.1} parent=0 // pred_check_branch
    %22 = sbr.rel (0) target = $region9
  $region8: #{color_loss.1} parent=0 // pred_region
    %s23 = sadd.s32 0, 0
    %p24 = scmp.lt.s32.totalorder %s23, 0
    %s25 = scalar_select %p24, %s23, 0
    %s26 = smul.u32 2, %s25
    %p27 = scmp.lt.s32.totalorder %s26, 1
    %s28 = scalar_select %p27, %s26, 1
    %s29 = smul.addr %s28, 8
    %s30 = scalar_lea.vmem %s1, %s29
    %s31 = sadd.s32 0, 0
    %p32 = scmp.lt.s32.totalorder %s31, 0
    %s33 = scalar_select %p32, %s31, 0
    %s34 = smul.u32 2, %s33
  $region9: #{color_loss.1} parent=0 // pred_fallthru
    _
  %s35 = sadd.s32 0, 0
  %p36 = scmp.lt.s32.totalorder %s35, 0
  %s37 = scalar_select %p36, %s35, 0
  %s38 = smul.u32 2, %s37
  %p39 = scmp.lt.s32.totalorder %s38, 1
  %s40 = scalar_select %p39, %s38, 1
  %s41 = smul.addr %s40, 8
  %s42 = scalar_lea.vmem %s0, %s41
  %s43 = sadd.s32 0, 0
  %p44 = scmp.lt.s32.totalorder %s43, 0
  %s45 = scalar_select %p44, %s43, 0
  %s46 = smul.u32 2, %s45
  %p47 = scmp.lt.s32.totalorder %s46, 1
  %s48 = scalar_select %p47, %s46, 1
  %s49 = smul.addr %s48, 8
  %s50 = scalar_lea.vmem %s1, %s49
  %s51 = sadd.s32 0, 0
  %p52 = scmp.lt.s32.totalorder %s51, 0
  %s53 = scalar_select %p52, %s51, 0
  %s54 = smul.u32 2, %s53
  %p55 = scmp.lt.s32.totalorder %s54, 1
  %s56 = scalar_select %p55, %s54, 1
  %s57 = smul.addr %s56, 8
  %s58 = scalar_lea.vmem %s0, %s57
  %s59 = sadd.s32 0, 0
  %p60 = scmp.lt.s32.totalorder %s59, 0
  %s61 = scalar_select %p60, %s59, 0
  %s62 = smul.u32 2, %s61
  %s63 = sadd.s32 0, 0
  %p64 = scmp.lt.s32.totalorder %s63, 0
  %s65 = scalar_select %p64, %s63, 0
  %s66 = smul.u32 2, %s65
  %p67 = scmp.lt.s32.totalorder %s66, 1
  %s68 = scalar_select %p67, %s66, 1
  %s69 = smul.addr %s68, 8
  %s70 = scalar_lea.vmem %s1, %s69
  %s71 = sadd.s32 0, 0
  %p72 = scmp.lt.s32.totalorder %s71, 0
  %s73 = scalar_select %p72, %s71, 0
  %s74 = smul.u32 2, %s73
  %p75 = scmp.eq.s32.totalorder 0, 0
  // Predicated region
  $region10: #{color_loss.1} parent=0 // pred_check
    %p76 = pneg %p75
  $region11: #{color_loss.1} parent=0 // pred_check_branch
    %78 = sbr.rel (%p76) target = $region13
  $region12: #{color_loss.1} parent=0 // pred_region
    %79 = vst [vmem:[#allocation2] sm:$0xff] 0.0
    %80 = vst [vmem:[#allocation2 + $0x8] sm:$0xff] 0.0
  $region13: #{color_loss.1} parent=0 // pred_fallthru
    _
  %s81 = sadd.s32 0, 0
  %s82 = smul.u32 %s81, 16
  %v83 = vlaneseq
  %v84 = vshrl.u32 %v83, 7
  %v85 = vadd.s32 %v84, 8
  %v86 = vstv %s82
  %v87 = vadd.s32 %v86, %v84
  %v88 = vadd.s32 %v86, %v85
  %vm89 = vcmp.lt.s32.totalorder %v87, 16
  %vm90 = vcmp.lt.s32.totalorder %v88, 16
  %v91 = vld [vmem:[%s58] sm:$0xff]
  %v92 = vld [vmem:[%s58 + $0x8] sm:$0xff]
  %v93 = vld [vmem:[%s70] sm:$0xff]
  %v94 = vld [vmem:[%s70 + $0x8] sm:$0xff]
  %v95 = vsub.f32 %v91, %v93
  %v96 = vsub.f32 %v92, %v94
  %v97 = vsel %vm89, 1, 0
  %v98 = vsel %vm90, 1, 0
  %vm99 = vcmp.eq.s32.totalorder %v97, 1
  %vm100 = vcmp.eq.s32.totalorder %v98, 1
  %v101 = vsel %vm99, %v95, 0.0
  %v102 = vsel %vm100, %v96, 0.0
  %v103 = vld [vmem:[#allocation2] sm:$0xff]
  %v104 = vld [vmem:[#allocation2 + $0x8] sm:$0xff]
  %v105 = vmul.f32 %v101, %v101
  %v106 = vmul.f32 %v102, %v102
  %v107 = vadd.f32 %v103, %v105
  %v108 = vadd.f32 %v104, %v106
  %109 = vst [vmem:[#allocation2] sm:$0xff] %v107
  %110 = vst [vmem:[#allocation2 + $0x8] sm:$0xff] %v108
  // Predicated region
  $region14: #{color_loss.1} parent=0 // pred_check
    %p111 = pneg %p75
  $region15: #{color_loss.1} parent=0 // pred_check_branch
    %113 = sbr.rel (%p111) target = $region17
  $region16: #{color_loss.1} parent=0 // pred_region
    %v114 = vld [vmem:[#allocation2] sm:$0xff]
    %v115 = vld [vmem:[#allocation2 + $0x8] sm:$0xff]
    %v116 = vadd.f32 %v114, %v115
    %117 = vadd.xlane.f32.xlu0 %v116
    %v118 = vpop.xlane.xlu0 %117
    %v119 = vrot.slane %v118, 4
    %v120 = vadd.f32 %v118, %v119
    %v121 = vrot.slane %v120, 2
    %v122 = vadd.f32 %v120, %v121
    %v123 = vrot.slane %v122, 1
    %v124 = vadd.f32 %v122, %v123
    %s125 = vtos %v124
    %s126 = smul.f32 %s125, 0.25
    %v127 = vstv %s126
    %128 = vst [vmem:[%s2] sm:$0xff] %v127
  $region17: #{color_loss.1} parent=0 // pred_fallthru
    _
  // Predicated region
  $region18: #{color_loss.1} parent=0 // pred_check
    _
  $region19: #{color_loss.1} parent=0 // pred_check_branch
    %130 = sbr.rel (0) target = $region21
  $region20: #{color_loss.1} parent=0 // pred_region
    _
  $region21: #{color_loss.1} parent=0 // pred_fallthru
    _
  // Predicated region
  $region22: #{color_loss.1} parent=0 // pred_check
    _
  $region23: #{color_loss.1} parent=0 // pred_check_branch
    %132 = sbr.rel (0) target = $region25
  $region24: #{color_loss.1} parent=0 // pred_region
    _
  $region25: #{color_loss.1} parent=0 // pred_fallthru
    _

</llo_original>
